<compile_context>
chip_gen: v5e
topology: v5e:2x2
jax: 0.10.0
libtpu: 0.0.40
codegen_flags: <defaults>
</compile_context>

<pallas_src>
import jax
import jax.numpy as jnp
from jax.experimental import pallas as pl
from jax.experimental.pallas import tpu as pltpu


def _round_up(x: int, m: int) -> int:
    return (x + m - 1) // m * m


def _vmem_capacity_bytes() -> int:
    try:
        info = pltpu.get_tpu_info()
        cap = getattr(info, "vmem_capacity_bytes", None)
        if cap:
            return int(cap)
    except Exception:
        pass
    return 64 * 1024 * 1024  # conservative default (v7x per-TC VMEM)


def _tile_vmem_bytes(b_tile, s_pad, hid, cond, o_pad, out_itemsize):
    """VMEM estimate for one grid step: streamed double-buffers + intermediates
    + resident (constant-index) weights/bias.  Returns (total, per_row, resident)."""
    per_row = (2 * 4 * s_pad * hid                    # hidden rows, f32, 2 buffers
               + 2 * s_pad * hid                      # in-kernel bf16 cast of hidden
               + 2 * 4 * cond                         # conds rows, f32, 2 buffers
               + 2 * out_itemsize * s_pad * o_pad     # output tile, 2 buffers
               + 4 * s_pad * o_pad)                   # f32 matmul accumulator
    resident = 2 * (2 * (hid + cond) * o_pad + 4 * o_pad)
    return b_tile * per_row + resident, per_row, resident


def _choose_b_tile(batch, s_pad, hid, cond, o_pad, out_itemsize, budget_bytes):
    _, per_row, resident = _tile_vmem_bytes(1, s_pad, hid, cond, o_pad, out_itemsize)
    max_bt = max(1, (budget_bytes - resident) // per_row)  # no silent 8-row overshoot
    if batch <= 8:
        # conds block sublane dim must be %8 or equal the full batch -> take the
        # whole (small) batch in one block.
        return batch
    # Multiple-of-8 tile, capped so the grid has >= 2 steps (keeps both v7x
    # TensorCores busy via dimension_semantics=("parallel",)).
    bt = min(int(max_bt), (batch + 1) // 2)
    bt = max(8, (bt // 8) * 8)
    # TODO(synk): if even 8 rows exceed the VMEM budget (very large S*H), add an
    # inner sequence-axis grid instead of overshooting.
    return bt


def _hidden_kernel(hidf_ref, cond_ref, wh_ref, wc_ref, b_ref, out_ref):
    bt, s_pad, o_pad = out_ref.shape
    # bf16 MXU operands (native rate on v5e/v6e/v7x), f32 accumulation.
    hid_proj = jnp.dot(hidf_ref[...].astype(jnp.bfloat16), wh_ref[...],
                       preferred_element_type=jnp.float32)
    cond_proj = jnp.dot(cond_ref[...].astype(jnp.bfloat16), wc_ref[...],
                        preferred_element_type=jnp.float32) + b_ref[...]
    # s_pad % 8 == 0 and o_pad % 128 == 0, so this reshape is a pure sublane
    # regrouping (no VMEM copy).  Broadcast the per-batch conds projection over
    # the sequence dim, tanh in f32 (EUP slot), cast only on the final store.
    out_ref[...] = jnp.tanh(hid_proj.reshape(bt, s_pad, o_pad)
                            + cond_proj[:, None, :]).astype(out_ref.dtype)


def hidden_forward(hidden, conds, weight, bias, *, b_tile=None,
                   out_dtype=jnp.float32):
    """tanh(cat([conds broadcast over S, hidden], -1) @ weight + bias).

    hidden: (B, S, H) f32
    conds:  (B, C)    f32
    weight: (C + H, O) f32  (stored transposed vs torch nn.Linear: computes x @ W)
    bias:   (O,)       f32
    returns (B, S, O) in `out_dtype` (default f32 to match the module; bf16
    halves the output HBM stream if the consumer tolerates it).
    """
    B, S, H = hidden.shape
    C = conds.shape[1]
    assert weight.shape[0] == C + H
    O = weight.shape[1]

    # Split the linear; cast the small, grid-resident weights to bf16 once.
    o_pad = _round_up(O, 128)
    wc = weight[:C].astype(jnp.bfloat16)
    wh = weight[C:].astype(jnp.bfloat16)
    bias_f32 = bias.astype(jnp.float32)
    if o_pad != O:
        wc = jnp.pad(wc, ((0, 0), (0, o_pad - O)))
        wh = jnp.pad(wh, ((0, 0), (0, o_pad - O)))
        bias_f32 = jnp.pad(bias_f32, (0, o_pad - O))
    bias2d = bias_f32.reshape(1, o_pad)

    # Sequence padded to a sublane multiple only when necessary (no-op for S%8==0).
    s_pad = _round_up(S, 8)
    if s_pad != S:
        # TODO(synk): replace with in-kernel masking to avoid this HBM pad for ragged S.
        hidden = jnp.pad(hidden, ((0, 0), (0, s_pad - S), (0, 0)))

    out_itemsize = jnp.dtype(out_dtype).itemsize
    vmem_cap = _vmem_capacity_bytes()
    budget = min(int(vmem_cap * 0.8), vmem_cap - (8 << 20))  # ~102 MiB v5e/v6e, ~51 MiB v7x
    if b_tile is None:
        b_tile = _choose_b_tile(B, s_pad, H, C, o_pad, out_itemsize, budget)
    b_tile = int(b_tile)

    grid = (pl.cdiv(B, b_tile),)            # ragged last batch block: no jnp.pad of hidden
    rows_per_tile = b_tile * s_pad
    # Flatten (free bitcast) so the big matmul is a plain dense 2D MXU contraction.
    hid_flat = hidden.reshape(B * s_pad, H)

    needed, _, _ = _tile_vmem_bytes(b_tile, s_pad, H, C, o_pad, out_itemsize)
    vmem_limit = int(min(vmem_cap - (4 << 20), max(needed + (4 << 20), 16 << 20)))

    out = pl.pallas_call(
        _hidden_kernel,
        out_shape=jax.ShapeDtypeStruct((B, s_pad, o_pad), out_dtype),
        grid_spec=pltpu.PrefetchScalarGridSpec(
            num_scalar_prefetch=0,
            grid=grid,
            in_specs=[
                pl.BlockSpec((rows_per_tile, H), lambda i: (i, 0)),  # hidden rows (streamed)
                pl.BlockSpec((b_tile, C), lambda i: (i, 0)),         # conds rows (streamed)
                pl.BlockSpec((H, o_pad), lambda i: (0, 0)),          # W_h (resident, bf16)
                pl.BlockSpec((C, o_pad), lambda i: (0, 0)),          # W_c (resident, bf16)
                pl.BlockSpec((1, o_pad), lambda i: (0, 0)),          # bias (resident, f32)
            ],
            out_specs=pl.BlockSpec((b_tile, s_pad, o_pad), lambda i: (i, 0, 0)),
        ),
        compiler_params=pltpu.CompilerParams(
            dimension_semantics=("parallel",),
            vmem_limit_bytes=vmem_limit,
        ),
    )(hid_flat, conds, wh, wc, bias2d)

    if s_pad != S or o_pad != O:
        out = out[:, :S, :O]   # lane/seq crop only; batch is never padded
    return out


def _reference(hidden, conds, weight, bias):
    B, S, _ = hidden.shape
    rep = jnp.broadcast_to(conds[:, None, :], (B, S, conds.shape[1]))
    concat = jnp.concatenate([rep, hidden], axis=-1)
    return jnp.tanh(concat @ weight + bias)


if __name__ == "__main__":
    # Module hyper-parameters (small, deterministic synthetic setup).
    cond_size = 32     # C
    hidden_size = 64   # H
    out_size = 48      # O (deliberately not a multiple of 128 -> exercises lane padding)
    B, S = 16, 8

    key = jax.random.PRNGKey(0)
    k_w, k_b, k_h, k_c = jax.random.split(key, 4)

    in_size = cond_size + hidden_size
    bound = (6.0 / (in_size + out_size)) ** 0.5      # xavier_uniform (init_hidden)
    # stored as (in, out) so the kernel computes x @ W  (== torch linear.weight^T)
    weight = jax.random.uniform(k_w, (in_size, out_size), jnp.float32, -bound, bound)
    bias = jax.random.uniform(k_b, (out_size,), jnp.float32, -0.1, 0.1)

    hidden = 0.5 * jax.random.normal(k_h, (B, S, hidden_size), jnp.float32)
    conds = 0.5 * jax.random.normal(k_c, (B, cond_size), jnp.float32)

    # Auto-chosen b_tile=8 here -> 2-step batch grid (exercises the pipeline and
    # keeps both v7x TensorCores busy).
    out = hidden_forward(hidden, conds, weight, bias)
    out = jax.block_until_ready(out)

    with jax.default_matmul_precision("float32"):
        ref = _reference(hidden, conds, weight, bias)

    assert out.shape == (B, S, out_size)
    err = float(jnp.max(jnp.abs(out.astype(jnp.float32) - ref)))
    # bf16 MXU operands with f32 accumulation -> loosened tolerance vs the f32 reference.
    assert err < 2e-2, f"mismatch vs reference, max abs err {err}"

    print("KERNEL_OK")
</pallas_src>

<mosaic_0001>
module attributes {stable_mosaic.version = 11 : i64} {
  func.func @_hidden_kernel(%arg0: i32, %arg1: memref<64x64xf32, #tpu.memory_space<vmem>>, %arg2: memref<8x32xf32, #tpu.memory_space<vmem>>, %arg3: memref<64x128xbf16, #tpu.memory_space<vmem>>, %arg4: memref<32x128xbf16, #tpu.memory_space<vmem>>, %arg5: memref<1x128xf32, #tpu.memory_space<vmem>>, %arg6: memref<8x8x128xf32, #tpu.memory_space<vmem>>) attributes {dimension_semantics = [#tpu.dimension_semantics<parallel>], iteration_bounds = array<i64: 2>, scalar_prefetch = 0 : i64, scratch_operands = 0 : i64, tpu.core_type = #tpu.core_type<tc>, window_params = [{transform_indices = @transform_0, window_bounds = array<i64: 64, 64>}, {transform_indices = @transform_1, window_bounds = array<i64: 8, 32>}, {pipeline_mode = #tpu.pipeline_mode<synchronous>, transform_indices = @transform_2, window_bounds = array<i64: 64, 128>}, {pipeline_mode = #tpu.pipeline_mode<synchronous>, transform_indices = @transform_3, window_bounds = array<i64: 32, 128>}, {pipeline_mode = #tpu.pipeline_mode<synchronous>, transform_indices = @transform_4, window_bounds = array<i64: 1, 128>}, {transform_indices = @transform_5, window_bounds = array<i64: 8, 8, 128>}]} {
    %c0 = arith.constant 0 : index
    %c0_0 = arith.constant 0 : index
    %0 = vector.load %arg1[%c0, %c0_0] : memref<64x64xf32, #tpu.memory_space<vmem>>, vector<64x64xf32>
    %1 = arith.truncf %0 : vector<64x64xf32> to vector<64x64xbf16>
    %c0_1 = arith.constant 0 : index
    %c0_2 = arith.constant 0 : index
    %2 = vector.load %arg3[%c0_1, %c0_2] : memref<64x128xbf16, #tpu.memory_space<vmem>>, vector<64x128xbf16>
    %cst = arith.constant dense<0.000000e+00> : vector<64x128xf32>
    %3 = tpu.matmul %1, %2, %cst {dimension_numbers = #tpu.dot_dimension_numbers<[1], [0], [0], [1], [0, 0, 1, 1], [], []>} : vector<64x64xbf16>, vector<64x128xbf16>, vector<64x128xf32> -> vector<64x128xf32>
    %c0_3 = arith.constant 0 : index
    %c0_4 = arith.constant 0 : index
    %4 = vector.load %arg2[%c0_3, %c0_4] : memref<8x32xf32, #tpu.memory_space<vmem>>, vector<8x32xf32>
    %5 = arith.truncf %4 : vector<8x32xf32> to vector<8x32xbf16>
    %c0_5 = arith.constant 0 : index
    %c0_6 = arith.constant 0 : index
    %6 = vector.load %arg4[%c0_5, %c0_6] : memref<32x128xbf16, #tpu.memory_space<vmem>>, vector<32x128xbf16>
    %cst_7 = arith.constant dense<0.000000e+00> : vector<8x128xf32>
    %7 = tpu.matmul %5, %6, %cst_7 {dimension_numbers = #tpu.dot_dimension_numbers<[1], [0], [0], [1], [0, 0, 1, 1], [], []>} : vector<8x32xbf16>, vector<32x128xbf16>, vector<8x128xf32> -> vector<8x128xf32>
    %c0_8 = arith.constant 0 : index
    %c0_9 = arith.constant 0 : index
    %8 = vector.load %arg5[%c0_8, %c0_9] : memref<1x128xf32, #tpu.memory_space<vmem>>, vector<1x128xf32>
    %9 = vector.broadcast %8 : vector<1x128xf32> to vector<8x128xf32>
    %10 = arith.addf %7, %9 : vector<8x128xf32>
    %11 = vector.shape_cast %3 : vector<64x128xf32> to vector<8x8x128xf32>
    %12 = vector.shape_cast %10 : vector<8x128xf32> to vector<8x1x128xf32>
    %13 = vector.broadcast %12 : vector<8x1x128xf32> to vector<8x8x128xf32>
    %14 = arith.addf %11, %13 : vector<8x8x128xf32>
    %15 = math.tanh %14 : vector<8x8x128xf32>
    %c0_10 = arith.constant 0 : index
    %c0_11 = arith.constant 0 : index
    %c0_12 = arith.constant 0 : index
    %16 = vector.load %arg6[%c0_10, %c0_11, %c0_12] : memref<8x8x128xf32, #tpu.memory_space<vmem>>, vector<8x8x128xf32>
    tpu.vector_store %arg6[%c0_10, %c0_11, %c0_12], %15 {strides = array<i32>} : memref<8x8x128xf32, #tpu.memory_space<vmem>>, vector<8x8x128xf32>,
    return
  }
  func.func @transform_0(%arg0: i32) -> (i32, i32) {
    %c0_i32 = arith.constant 0 : i32
    %c0_i32_0 = arith.constant 0 : i32
    return %arg0, %c0_i32 : i32, i32
  }
  func.func @transform_1(%arg0: i32) -> (i32, i32) {
    %c0_i32 = arith.constant 0 : i32
    %c0_i32_0 = arith.constant 0 : i32
    return %arg0, %c0_i32 : i32, i32
  }
  func.func @transform_2(%arg0: i32) -> (i32, i32) {
    %c0_i32 = arith.constant 0 : i32
    %c0_i32_0 = arith.constant 0 : i32
    %c0_i32_1 = arith.constant 0 : i32
    return %c0_i32, %c0_i32_0 : i32, i32
  }
  func.func @transform_3(%arg0: i32) -> (i32, i32) {
    %c0_i32 = arith.constant 0 : i32
    %c0_i32_0 = arith.constant 0 : i32
    %c0_i32_1 = arith.constant 0 : i32
    return %c0_i32, %c0_i32_0 : i32, i32
  }
  func.func @transform_4(%arg0: i32) -> (i32, i32) {
    %c0_i32 = arith.constant 0 : i32
    %c0_i32_0 = arith.constant 0 : i32
    %c0_i32_1 = arith.constant 0 : i32
    return %c0_i32, %c0_i32_0 : i32, i32
  }
  func.func @transform_5(%arg0: i32) -> (i32, i32, i32) {
    %c0_i32 = arith.constant 0 : i32
    %c0_i32_0 = arith.constant 0 : i32
    %c0_i32_1 = arith.constant 0 : i32
    return %arg0, %c0_i32, %c0_i32_0 : i32, i32, i32
  }
}

</mosaic_0001>

<llo_original>
// kernel: tpu_custom_call.1
$region0: #{tpu_custom_call.1}
  #allocation0 [shape = 'u32[]', space=smem, size = 0x4, offset = 0x4, fixed_abs, tag = 'smem constant byte address 0x4 - core index']
  #allocation1 [shape = 'u32[72,128]{1,0:T(1,128)}', space=vmem, size = 0x9000, scoped, tag = 'internal scratch']
  %s0 = inlined_call_operand.vmem [shape: f32[128,64], index: 0, kind: input, shape index: {}]
  %s1 = inlined_call_operand.vmem [shape: f32[16,32], index: 1, kind: input, shape index: {}]
  %s2 = inlined_call_operand.vmem [shape: bf16[64,128], index: 2, kind: input, shape index: {}]
  %s3 = inlined_call_operand.vmem [shape: bf16[32,128], index: 3, kind: input, shape index: {}]
  %s4 = inlined_call_operand.vmem [shape: f32[1,128], index: 4, kind: input, shape index: {}]
  %s5 = inlined_call_operand.hbm [shape: f32[16,8,128], index: 5, kind: output, shape index: {}]
  %s6 = sld [smem:[#allocation0]]
  $region53: #{tpu_custom_call.1} parent=0
    _
  %s8 = ssub.s32 1, %s6
  %s9 = scalar_select 0, %s8, %s6
  $region1: #{tpu_custom_call.1} parent=0
    #allocation2 [shape = 'u8[65536]{0}', space=vmem, size = 0x10000, scoped, tag = 'output window, operand 0']
    #allocation3 [shape = 's32[2]{0}', space=sflag, size = 0x8, scoped, tag = 'scoped memory for tpu_custom_call.1']
    %10 = vsyncpa [#allocation3], 0
    %s11 = scalar_lea.sflag [#allocation3], 1
    %12 = vsyncpa %s11, 0
    loop: start=0, step=1, limit=4
    $region2: #{tpu_custom_call.1} parent=1 // loop_pre_header
      _
    $region3: #{tpu_custom_call.1} parent=1 // loop_header
      %s14 = sphi 0, %s18
      %p15 = scmp.ge.s32.totalorder %s14, 4
      %s24 = sphi 0, %s26
      %s27 = sphi 0, %s24
      %s28 = sphi 0, %s27
      %s44 = sphi 0, %s28
      %s50 = sphi 0, %s52
      %s53 = sphi 0, %s50
      %s54 = sphi 0, %s53
      %s70 = sphi 0, %s54
      %s74 = sphi 0, %s74
      %s76 = sphi 0, %s74
      %s77 = sphi 0, %s76
      %s91 = sphi 0, %s77
      %s95 = sphi 0, %s95
      %s97 = sphi 0, %s95
      %s98 = sphi 0, %s97
      %s112 = sphi 0, %s98
      %s116 = sphi 0, %s116
      %s118 = sphi 0, %s116
      %s119 = sphi 0, %s118
      %s133 = sphi 0, %s119
      %s139 = sphi 0, %s141
      %s142 = sphi 0, %s139
      %s143 = sphi 0, %s142
      %s159 = sphi 0, %s143
    $region4: #{tpu_custom_call.1} parent=1 // loop_header_branch
      %17 = sbr.rel (%p15) target = $region8
    $region5: #{tpu_custom_call.1} parent=1 // loop_body
      %s19 = ssub.s32 %s14, 1
      %s20 = ssub.s32 %s14, 2
      %s21 = sadd.s32 %s14, 1
      %s22 = ssub.s32 %s14, %s21
      %p23 = scmp.eq.s32.totalorder %s22, 0
      %s25 = sadd.s32 %s24, 1
      %s26 = scalar_select %p23, %s24, %s25
      %p29 = pneg %p23
      %p30 = scmp.eq.s32.totalorder %s14, 1
      %p31 = por %p29, %p30
      %p32 = scmp.ne.s32.totalorder %s24, %s27
      %p33 = scmp.eq.s32.totalorder %s14, 0
      %p34 = por %p32, %p33
      %p35 = scmp.ne.s32.totalorder %s24, %s27
      %p36 = scmp.eq.s32.totalorder %s19, 1
      %p37 = por %p35, %p36
      %p38 = scmp.ne.s32.totalorder %s27, %s28
      %p39 = scmp.eq.s32.totalorder %s19, 0
      %p40 = por %p38, %p39
      %p41 = scmp.ne.s32.totalorder %s27, %s28
      %p42 = scmp.eq.s32.totalorder %s20, 1
      %p43 = por %p41, %p42
      %p45 = scmp.ne.s32.totalorder %s28, %s44
      %p46 = scmp.eq.s32.totalorder %s20, 0
      %p47 = por %p45, %p46
      %s48 = ssub.s32 %s14, %s21
      %p49 = scmp.eq.s32.totalorder %s48, 0
      %s51 = sadd.s32 %s50, 1
      %s52 = scalar_select %p49, %s50, %s51
      %p55 = pneg %p49
      %p56 = scmp.eq.s32.totalorder %s14, 1
      %p57 = por %p55, %p56
      %p58 = scmp.ne.s32.totalorder %s50, %s53
      %p59 = scmp.eq.s32.totalorder %s14, 0
      %p60 = por %p58, %p59
      %p61 = scmp.ne.s32.totalorder %s50, %s53
      %p62 = scmp.eq.s32.totalorder %s19, 1
      %p63 = por %p61, %p62
      %p64 = scmp.ne.s32.totalorder %s53, %s54
      %p65 = scmp.eq.s32.totalorder %s19, 0
      %p66 = por %p64, %p65
      %p67 = scmp.ne.s32.totalorder %s53, %s54
      %p68 = scmp.eq.s32.totalorder %s20, 1
      %p69 = por %p67, %p68
      %p71 = scmp.ne.s32.totalorder %s54, %s70
      %p72 = scmp.eq.s32.totalorder %s20, 0
      %p73 = por %p71, %p72
      %s75 = sadd.s32 %s74, 1
      %p78 = scmp.eq.s32.totalorder %s14, 1
      %p79 = scmp.ne.s32.totalorder %s74, %s76
      %p80 = scmp.eq.s32.totalorder %s14, 0
      %p81 = por %p79, %p80
      %p82 = scmp.ne.s32.totalorder %s74, %s76
      %p83 = scmp.eq.s32.totalorder %s19, 1
      %p84 = por %p82, %p83
      %p85 = scmp.ne.s32.totalorder %s76, %s77
      %p86 = scmp.eq.s32.totalorder %s19, 0
      %p87 = por %p85, %p86
      %p88 = scmp.ne.s32.totalorder %s76, %s77
      %p89 = scmp.eq.s32.totalorder %s20, 1
      %p90 = por %p88, %p89
      %p92 = scmp.ne.s32.totalorder %s77, %s91
      %p93 = scmp.eq.s32.totalorder %s20, 0
      %p94 = por %p92, %p93
      %s96 = sadd.s32 %s95, 1
      %p99 = scmp.eq.s32.totalorder %s14, 1
      %p100 = scmp.ne.s32.totalorder %s95, %s97
      %p101 = scmp.eq.s32.totalorder %s14, 0
      %p102 = por %p100, %p101
      %p103 = scmp.ne.s32.totalorder %s95, %s97
      %p104 = scmp.eq.s32.totalorder %s19, 1
      %p105 = por %p103, %p104
      %p106 = scmp.ne.s32.totalorder %s97, %s98
      %p107 = scmp.eq.s32.totalorder %s19, 0
      %p108 = por %p106, %p107
      %p109 = scmp.ne.s32.totalorder %s97, %s98
      %p110 = scmp.eq.s32.totalorder %s20, 1
      %p111 = por %p109, %p110
      %p113 = scmp.ne.s32.totalorder %s98, %s112
      %p114 = scmp.eq.s32.totalorder %s20, 0
      %p115 = por %p113, %p114
      %s117 = sadd.s32 %s116, 1
      %p120 = scmp.eq.s32.totalorder %s14, 1
      %p121 = scmp.ne.s32.totalorder %s116, %s118
      %p122 = scmp.eq.s32.totalorder %s14, 0
      %p123 = por %p121, %p122
      %p124 = scmp.ne.s32.totalorder %s116, %s118
      %p125 = scmp.eq.s32.totalorder %s19, 1
      %p126 = por %p124, %p125
      %p127 = scmp.ne.s32.totalorder %s118, %s119
      %p128 = scmp.eq.s32.totalorder %s19, 0
      %p129 = por %p127, %p128
      %p130 = scmp.ne.s32.totalorder %s118, %s119
      %p131 = scmp.eq.s32.totalorder %s20, 1
      %p132 = por %p130, %p131
      %p134 = scmp.ne.s32.totalorder %s119, %s133
      %p135 = scmp.eq.s32.totalorder %s20, 0
      %p136 = por %p134, %p135
      %s137 = ssub.s32 %s14, %s21
      %p138 = scmp.eq.s32.totalorder %s137, 0
      %s140 = sadd.s32 %s139, 1
      %s141 = scalar_select %p138, %s139, %s140
      %p144 = pneg %p138
      %p145 = scmp.eq.s32.totalorder %s14, 1
      %p146 = por %p144, %p145
      %p147 = scmp.ne.s32.totalorder %s139, %s142
      %p148 = scmp.eq.s32.totalorder %s14, 0
      %p149 = por %p147, %p148
      %p150 = scmp.ne.s32.totalorder %s139, %s142
      %p151 = scmp.eq.s32.totalorder %s19, 1
      %p152 = por %p150, %p151
      %p153 = scmp.ne.s32.totalorder %s142, %s143
      %p154 = scmp.eq.s32.totalorder %s19, 0
      %p155 = por %p153, %p154
      %p156 = scmp.ne.s32.totalorder %s142, %s143
      %p157 = scmp.eq.s32.totalorder %s20, 1
      %p158 = por %p156, %p157
      %p160 = scmp.ne.s32.totalorder %s143, %s159
      %p161 = scmp.eq.s32.totalorder %s20, 0
      %p162 = por %p160, %p161
      %p163 = scmp.le.s32.totalorder 1, %s14
      %p164 = scmp.lt.s32.totalorder %s14, 3
      %p165 = pnand %p163, %p164
      %p166 = pneg %p165
      // Predicated region
      $region9: #{tpu_custom_call.1} parent=5 // pred_check
        _
      $region10: #{tpu_custom_call.1} parent=5 // pred_check_branch
        %168 = sbr.rel (%p165) target = $region12
      $region11: #{tpu_custom_call.1} parent=5 // pred_region
        %s169 = ssub.s32 %s14, 1
        // Predicated region
        $region13: #{tpu_custom_call.1} parent=11 // pred_check
          %p170 = pneg %p87
        $region14: #{tpu_custom_call.1} parent=11 // pred_check_branch
          %172 = sbr.rel (%p170) target = $region16
        $region15: #{tpu_custom_call.1} parent=11 // pred_region
          _
        $region16: #{tpu_custom_call.1} parent=11 // pred_fallthru
          _
        // Predicated region
        $region17: #{tpu_custom_call.1} parent=11 // pred_check
          %p173 = pneg %p108
        $region18: #{tpu_custom_call.1} parent=11 // pred_check_branch
          %175 = sbr.rel (%p173) target = $region20
        $region19: #{tpu_custom_call.1} parent=11 // pred_region
          _
        $region20: #{tpu_custom_call.1} parent=11 // pred_fallthru
          _
        // Predicated region
        $region21: #{tpu_custom_call.1} parent=11 // pred_check
          %p176 = pneg %p129
        $region22: #{tpu_custom_call.1} parent=11 // pred_check_branch
          %178 = sbr.rel (%p176) target = $region24
        $region23: #{tpu_custom_call.1} parent=11 // pred_region
          _
        $region24: #{tpu_custom_call.1} parent=11 // pred_fallthru
          _
      $region12: #{tpu_custom_call.1} parent=5 // pred_fallthru
        _
      %p179 = scmp.lt.s32.totalorder %s14, 2
      // Predicated region
      $region25: #{tpu_custom_call.1} parent=5 // pred_check
        %p180 = pneg %p179
      $region26: #{tpu_custom_call.1} parent=5 // pred_check_branch
        %182 = sbr.rel (%p180) target = $region28
      $region27: #{tpu_custom_call.1} parent=5 // pred_region
        // Predicated region
        $region29: #{tpu_custom_call.1} parent=27 // pred_check
          %p183 = pneg %p34
        $region30: #{tpu_custom_call.1} parent=27 // pred_check_branch
          %185 = sbr.rel (%p183) target = $region32
        $region31: #{tpu_custom_call.1} parent=27 // pred_region
          %s186 = smul.u32 8, %s14
          %p187 = scmp.lt.s32.totalorder %s186, 15
          %s188 = scalar_select %p187, %s186, 15
          %s189 = smul.addr %s188, 8
          %s190 = scalar_lea.vmem %s0, %s189
          %s191 = smul.u32 8, %s14
        $region32: #{tpu_custom_call.1} parent=27 // pred_fallthru
          _
        // Predicated region
        $region33: #{tpu_custom_call.1} parent=27 // pred_check
          %p192 = pneg %p60
        $region34: #{tpu_custom_call.1} parent=27 // pred_check_branch
          %194 = sbr.rel (%p192) target = $region36
        $region35: #{tpu_custom_call.1} parent=27 // pred_region
          %p195 = scmp.lt.s32.totalorder %s14, 1
          %s196 = scalar_select %p195, %s14, 1
          %s197 = smul.addr %s196, 8
          %s198 = scalar_lea.vmem %s1, %s197
        $region36: #{tpu_custom_call.1} parent=27 // pred_fallthru
          _
      $region28: #{tpu_custom_call.1} parent=5 // pred_fallthru
        _
      %p199 = scmp.le.s32.totalorder 1, %s14
      %p200 = scmp.lt.s32.totalorder %s14, 3
      %p201 = pnand %p199, %p200
      %p202 = pneg %p201
      // Predicated region
      $region37: #{tpu_custom_call.1} parent=5 // pred_check
        _
      $region38: #{tpu_custom_call.1} parent=5 // pred_check_branch
        %204 = sbr.rel (%p201) target = $region40
      $region39: #{tpu_custom_call.1} parent=5 // pred_region
        %s205 = ssub.s32 %s14, 1
        %s206 = smul.u32 8, %s19
        %p207 = scmp.lt.s32.totalorder %s206, 15
        %s208 = scalar_select %p207, %s206, 15
        %s209 = smul.addr %s208, 8
        %s210 = scalar_lea.vmem %s0, %s209
        %p211 = pneg %p40
        %p212 = pneg %p37
        %p213 = scmp.lt.s32.totalorder %s19, 1
        %s214 = scalar_select %p213, %s19, 1
        %s215 = smul.addr %s214, 8
        %s216 = scalar_lea.vmem %s1, %s215
        %p217 = pneg %p66
        %p218 = pneg %p63
        %p219 = pneg %p87
        %p220 = pneg %p84
        %p221 = pneg %p108
        %p222 = pneg %p105
        %p223 = pneg %p129
        %p224 = pneg %p126
        %p225 = pneg %p155
        %p226 = pneg %p152
        %s227 = sand.u32 %s142, 1
        %s228 = scalar_lea.sflag [#allocation3], %s227
        %s229 = sand.u32 %s142, 1
        %s230 = smul.addr %s229, 64
        %s231 = scalar_lea.vmem [#allocation2], %s230
        %s232 = smul.u32 8, %s19
        %p233 = scmp.lt.s32.totalorder %s232, 15
        %s234 = scalar_select %p233, %s232, 15
        %s235 = smul.addr %s234, 8
        %s236 = scalar_lea.vmem %s0, %s235
        %s237 = smul.u32 8, %s19
        %p238 = scmp.lt.s32.totalorder %s19, 1
        %s239 = scalar_select %p238, %s19, 1
        %s240 = smul.addr %s239, 8
        %s241 = scalar_lea.vmem %s1, %s240
        %s242 = smul.u32 8, %s19
        %v244 = vld [vmem:[%s236] sm:$0xff]
        %v245 = vld [vmem:[%s236 + $0x8] sm:$0xff]
        %v246 = vld [vmem:[%s236 + $0x10] sm:$0xff]
        %v247 = vld [vmem:[%s236 + $0x18] sm:$0xff]
        %v248 = vld [vmem:[%s236 + $0x20] sm:$0xff]
        %v249 = vld [vmem:[%s236 + $0x28] sm:$0xff]
        %v250 = vld [vmem:[%s236 + $0x30] sm:$0xff]
        %v251 = vld [vmem:[%s236 + $0x38] sm:$0xff]
        %v252 = vpack.c.bf16 %v245, %v244
        %v253 = vpack.c.bf16 %v247, %v246
        %v254 = vpack.c.bf16 %v249, %v248
        %v255 = vpack.c.bf16 %v251, %v250
        %v256 = vld [vmem:[%s2] sm:$0xf]
        %v257 = vld [vmem:[%s2 + $0x4] sm:$0xf]
        %v258 = vld [vmem:[%s2 + $0x8] sm:$0xf]
        %v259 = vld [vmem:[%s2 + $0xc] sm:$0xf]
        %v260 = vld [vmem:[%s2 + $0x10] sm:$0xf]
        %v261 = vld [vmem:[%s2 + $0x14] sm:$0xf]
        %v262 = vld [vmem:[%s2 + $0x18] sm:$0xf]
        %v263 = vld [vmem:[%s2 + $0x1c] sm:$0xf]
        %v272 = vunpack.c.l.b16 %v256
        %v273 = vunpack.c.l.b16 %v257
        %v274 = vunpack.c.l.b16 %v258
        %v275 = vunpack.c.l.b16 %v259
        %v276 = vunpack.c.l.b16 %v260
        %v277 = vunpack.c.l.b16 %v261
        %v278 = vunpack.c.l.b16 %v262
        %v279 = vunpack.c.l.b16 %v263
        %v280 = vpack.c.b16 %v273, %v272
        %v281 = vpack.c.b16 %v275, %v274
        %v282 = vpack.c.b16 %v277, %v276
        %v283 = vpack.c.b16 %v279, %v278
        %vm288 = vcmask 523264
        %v290 = vsel %vm288, %v252, 0
        %v293 = vsel %vm288, %v253, 0
        %v296 = vsel %vm288, %v254, 0
        %v299 = vsel %vm288, %v255, 0
        %301 = vmatpush.bf16.msra.mxu0 0
        %302 = vmatpush.bf16.msra.mxu0 0
        %303 = vmatpush.bf16.msra.mxu0 0
        %304 = vmatpush.bf16.msra.mxu0 0
        %305 = vmatpush.bf16.msra.mxu0 %v283
        %306 = vmatpush.bf16.msra.mxu0 %v282
        %307 = vmatpush.bf16.msra.mxu0 %v281
        %308 = vmatpush.bf16.msra.mxu0 %v280
        %309 = vmatmul.bf16.gmra.mxu0 %v290
        %v310 = vpop.f32.mrf.mxu0
        %v311 = vadd.f32 0.0, %v310
        %v312 = vpop.f32.mrf.mxu0
        %v313 = vadd.f32 0.0, %v312
        %314 = vmatmul.bf16.gmra.mxu0 %v293
        %v315 = vpop.f32.mrf.mxu0
        %v316 = vadd.f32 0.0, %v315
        %v317 = vpop.f32.mrf.mxu0
        %v318 = vadd.f32 0.0, %v317
        %319 = vmatmul.bf16.gmra.mxu0 %v296
        %v320 = vpop.f32.mrf.mxu0
        %v321 = vadd.f32 0.0, %v320
        %v322 = vpop.f32.mrf.mxu0
        %v323 = vadd.f32 0.0, %v322
        %324 = vmatmul.bf16.gmra.mxu0 %v299
        %v325 = vpop.f32.mrf.mxu0
        %v326 = vadd.f32 0.0, %v325
        %v327 = vpop.f32.mrf.mxu0
        %v328 = vadd.f32 0.0, %v327
        %329 = vdwg.mxu0
        %v330 = vld [vmem:[%s241] sm:$0xff]
        %v331 = vpack.c.bf16 %v330, %v330
        %v332 = vld [vmem:[%s3] sm:$0xf]
        %v333 = vld [vmem:[%s3 + $0x4] sm:$0xf]
        %v334 = vld [vmem:[%s3 + $0x8] sm:$0xf]
        %v335 = vld [vmem:[%s3 + $0xc] sm:$0xf]
        %v336 = vld [vmem:[%s4] sm:$0x1]
        %v338 = vperm.slane %v336, 0
        %v344 = vunpack.c.l.b16 %v332
        %v345 = vunpack.c.l.b16 %v333
        %v346 = vunpack.c.l.b16 %v334
        %v347 = vunpack.c.l.b16 %v335
        %v348 = vpack.c.b16 %v345, %v344
        %v349 = vpack.c.b16 %v347, %v346
        %vm352 = vcmask 261120
        %v354 = vsel %vm352, %v331, 0
        %356 = vmatpush.bf16.msra.mxu0 0
        %357 = vmatpush.bf16.msra.mxu0 0
        %358 = vmatpush.bf16.msra.mxu0 0
        %359 = vmatpush.bf16.msra.mxu0 0
        %360 = vmatpush.bf16.msra.mxu0 0
        %361 = vmatpush.bf16.msra.mxu0 0
        %362 = vmatpush.bf16.msra.mxu0 %v349
        %363 = vmatpush.bf16.msra.mxu0 %v348
        %364 = vmatmul.bf16.gmra.mxu0 %v354
        %v365 = vpop.f32.mrf.mxu0
        %v366 = vadd.f32 %v338, %v365
        %v367 = vpop.f32.mrf.mxu0
        %368 = vdwg.mxu0
        %v370 = vrot.slane %v366, 1
        %v371 = vrot.slane %v366, 2
        %v372 = vrot.slane %v366, 3
        %v373 = vrot.slane %v366, 4
        %v374 = vrot.slane %v366, 5
        %v375 = vrot.slane %v366, 6
        %v376 = vrot.slane %v366, 7
        %v377 = vperm.slane %v366, 0
        %v378 = vperm.slane %v370, 0
        %v379 = vperm.slane %v371, 0
        %v380 = vperm.slane %v372, 0
        %v381 = vperm.slane %v373, 0
        %v382 = vperm.slane %v374, 0
        %v383 = vperm.slane %v375, 0
        %v384 = vperm.slane %v376, 0
        %v393 = vadd.f32 %v311, %v377
        %v394 = vadd.f32 %v313, %v378
        %v395 = vadd.f32 %v316, %v379
        %v396 = vadd.f32 %v318, %v380
        %v397 = vadd.f32 %v321, %v381
        %v398 = vadd.f32 %v323, %v382
        %v399 = vadd.f32 %v326, %v383
        %v400 = vadd.f32 %v328, %v384
        %v401 = vtanh.pop %v393
        %v402 = vtanh.pop %v394
        %v403 = vtanh.pop %v395
        %v404 = vtanh.pop %v396
        %v405 = vtanh.pop %v397
        %v406 = vtanh.pop %v398
        %v407 = vtanh.pop %v399
        %v408 = vtanh.pop %v400
        %409 = vst [vmem:[%s231] sm:$0xff] %v401
        %410 = vst [vmem:[%s231 + $0x8] sm:$0xff] %v402
        %411 = vst [vmem:[%s231 + $0x10] sm:$0xff] %v403
        %412 = vst [vmem:[%s231 + $0x18] sm:$0xff] %v404
        %413 = vst [vmem:[%s231 + $0x20] sm:$0xff] %v405
        %414 = vst [vmem:[%s231 + $0x28] sm:$0xff] %v406
        %415 = vst [vmem:[%s231 + $0x30] sm:$0xff] %v407
        %416 = vst [vmem:[%s231 + $0x38] sm:$0xff] %v408
        %s417 = sand.u32 %s142, 1
        %s418 = scalar_lea.sflag [#allocation3], %s417
        %s419 = sand.u32 %s142, 1
        %s420 = smul.addr %s419, 64
        %s421 = scalar_lea.vmem [#allocation2], %s420
        // Predicated region
        $region41: #{tpu_custom_call.1} parent=39 // pred_check
          %p422 = pneg %p152
        $region42: #{tpu_custom_call.1} parent=39 // pred_check_branch
          %424 = sbr.rel (%p422) target = $region44
        $region43: #{tpu_custom_call.1} parent=39 // pred_region
          %s425 = smul.u32 8, %s19
          %427 = vsyncadd %s418, 0
          %s428 = smul.addr %s425, 8
          %s429 = scalar_lea.hbm %s5, %s428
          %s430 = sshll.u32 %s421, 4
          %s431 = int_to_ptr.vmem [resolvable:$true] %s430
          %s432 = sshll.u32 %s429, 4
          %s433 = int_to_ptr.hbm [resolvable:$true] %s432
          %438 = dma.vmem_to_hbm [thread:$0]  %s431, 1024, %s433, %s418, 128, 128, 8
        $region44: #{tpu_custom_call.1} parent=39 // pred_fallthru
          _
      $region40: #{tpu_custom_call.1} parent=5 // pred_fallthru
        _
      %p439 = scmp.le.s32.totalorder 2, %s14
      // Predicated region
      $region45: #{tpu_custom_call.1} parent=5 // pred_check
        %p440 = pneg %p439
      $region46: #{tpu_custom_call.1} parent=5 // pred_check_branch
        %442 = sbr.rel (%p440) target = $region48
      $region47: #{tpu_custom_call.1} parent=5 // pred_region
        %s443 = ssub.s32 %s14, 2
        // Predicated region
        $region49: #{tpu_custom_call.1} parent=47 // pred_check
          %p444 = pneg %p158
        $region50: #{tpu_custom_call.1} parent=47 // pred_check_branch
          %446 = sbr.rel (%p444) target = $region52
        $region51: #{tpu_custom_call.1} parent=47 // pred_region
          %s447 = sand.u32 %s143, 1
          %s448 = scalar_lea.sflag [#allocation3], %s447
          %s449 = sand.u32 %s143, 1
          %s450 = smul.addr %s449, 64
          %s451 = scalar_lea.vmem [#allocation2], %s450
          %453 = dma.done %s448, 1024
        $region52: #{tpu_custom_call.1} parent=47 // pred_fallthru
          _
      $region48: #{tpu_custom_call.1} parent=5 // pred_fallthru
        _
    $region6: #{tpu_custom_call.1} parent=1 // loop_footer
      %s18 = sadd.s32 1, %s14
    $region7: #{tpu_custom_call.1} parent=1 // loop_footer_branch
      %13 = sbr.rel target = $region3
    $region8: #{tpu_custom_call.1} parent=1 // loop_exit
      _
    %454 = vsyncpa [#allocation3], 1
    %s455 = scalar_lea.sflag [#allocation3], 1
    %456 = vsyncpa %s455, 1

</llo_original>
